<compile_context>
chip_gen: v7x
topology: tpu7x:2x2x1
jax: 0.10.0
libtpu: 0.0.40
codegen_flags: <defaults>
</compile_context>

<pallas_src>
import functools

import jax
import jax.numpy as jnp
from jax.experimental import pallas as pl
from jax.experimental.pallas import tpu as pltpu


# ----------------------------- Pallas kernel --------------------------------

def _spatial_attention_kernel(w_ref, x_ref, o_ref, sum_buf, max_buf, *, K, pad):
    """Fused SpatialAttention forward for one batch block.

    w_ref   : (2*K,) f32 SMEM (scalar-prefetch)
              [avg taps 0..K-1 with 1/C pre-folded, max taps 0..K-1]
    x_ref   : (block_b, C, L) VMEM input block (C on sublanes, L on lanes)
    o_ref   : (block_b, L)    VMEM lane-dense output block
    sum_buf : (block_b, L+2*pad) f32 VMEM scratch (padded channel-sum)
    max_buf : (block_b, L+2*pad) f32 VMEM scratch (padded channel-max)
    """
    bb, L = o_ref.shape

    # ---- reduce over channels ONCE (cheap sublane reductions, f32 accum) ----
    x = x_ref[...].astype(jnp.float32)          # (bb, C, L)
    s = jnp.sum(x, axis=1)                      # (bb, L)  (1/C folded into weights)
    m = jnp.max(x, axis=1)                      # (bb, L)

    # ---- write reduced values + only the 2*pad boundary zero columns --------
    if pad > 0:
        z = jnp.zeros((bb, pad), jnp.float32)
        sum_buf[:, pl.ds(0, pad)] = z
        sum_buf[:, pl.ds(L + pad, pad)] = z
        max_buf[:, pl.ds(0, pad)] = z
        max_buf[:, pl.ds(L + pad, pad)] = z
    sum_buf[:, pl.ds(pad, L)] = s
    max_buf[:, pl.ds(pad, L)] = m

    # ---- hoisted scalar weight reads ----------------------------------------
    wa = [w_ref[k] for k in range(K)]           # avg-channel taps (already / C)
    wm = [w_ref[K + k] for k in range(K)]       # max-channel taps

    # ---- K-tap conv over the tiny reduced buffers (statically unrolled) -----
    acc = wa[0] * sum_buf[:, pl.ds(0, L)] + wm[0] * max_buf[:, pl.ds(0, L)]
    for k in range(1, K):
        acc = acc + wa[k] * sum_buf[:, pl.ds(k, L)] + wm[k] * max_buf[:, pl.ds(k, L)]

    o_ref[...] = jax.nn.sigmoid(acc).astype(o_ref.dtype)   # sigmoid -> EUP


# ----------------------------- wrapper ---------------------------------------

def _pick_block_b(B, C, L, itemsize, budget_bytes=8 << 20):
    """Largest batch block whose double-buffered input fits a v5e-safe budget."""
    per_b = max(1, C * L * itemsize) * 2        # x block, double-buffered
    target = max(1, budget_bytes // per_b)
    if target >= B:
        return B
    cand = (min(target, B) // 8) * 8            # keep sublane dim 8-aligned
    while cand >= 8:
        if B % cand == 0:
            return cand
        cand -= 8
    return B                                    # fallback: whole batch, grid=(1,)


def spatial_attention_forward(x, w_flat, *, kernel_size=3, block_b=None):
    """x: (B, C, L) NCW; w_flat: (2*K,) = [avg taps / C, max taps]. Returns (B,1,L)."""
    B, C, L = x.shape
    K = kernel_size
    assert K in (1, 3, 7), "kernel size must be 1, 3 or 7"
    pad = (K - 1) // 2
    assert w_flat.shape == (2 * K,)

    if block_b is None:
        block_b = _pick_block_b(B, C, L, jnp.dtype(x.dtype).itemsize)
    assert B % block_b == 0
    grid = (B // block_b,)

    kernel = functools.partial(_spatial_attention_kernel, K=K, pad=pad)
    out2d = pl.pallas_call(
        kernel,
        out_shape=jax.ShapeDtypeStruct((B, L), x.dtype),
        grid_spec=pltpu.PrefetchScalarGridSpec(
            num_scalar_prefetch=1,              # w_flat -> SMEM, passed first to kernel
            grid=grid,
            in_specs=[pl.BlockSpec((block_b, C, L), lambda b, w: (b, 0, 0))],
            out_specs=pl.BlockSpec((block_b, L), lambda b, w: (b, 0)),
            scratch_shapes=[
                pltpu.VMEM((block_b, L + 2 * pad), jnp.float32),
                pltpu.VMEM((block_b, L + 2 * pad), jnp.float32),
            ],
        ),
        compiler_params=pltpu.CompilerParams(
            dimension_semantics=("parallel",),  # shard batch across TCs on v7x
        ),
    )(w_flat, x)
    return out2d[:, None, :]                    # back to PyTorch's (B, 1, L)


def prepare_weights(w, C):
    """One-time prep: PyTorch Conv1d weight (1, 2, K) -> (2*K,) with 1/C folded
    into the avg-channel taps (kernel then uses sum instead of mean)."""
    K = w.shape[-1]
    return jnp.concatenate([w[0, 0, :] / jnp.float32(C), w[0, 1, :]]).astype(jnp.float32)


# ----------------------------- plain-JAX reference ---------------------------

def spatial_attention_reference(x, w):
    """Straight transcription of the PyTorch forward. w: (1, 2, K)."""
    B, _, L = x.shape
    K = w.shape[-1]
    pad = (K - 1) // 2
    avg = jnp.mean(x, axis=1, keepdims=True)
    mx = jnp.max(x, axis=1, keepdims=True)
    s = jnp.concatenate([avg, mx], axis=1)                 # (B, 2, L)
    sp = jnp.pad(s, ((0, 0), (0, 0), (pad, pad)))
    y = jnp.zeros((B, 1, L), jnp.float32)
    for c in range(2):
        for k in range(K):
            y = y + w[0, c, k] * sp[:, c:c + 1, k:k + L]
    return jax.nn.sigmoid(y)


# ----------------------------- main -------------------------------------------

if __name__ == "__main__":
    B, C, L = 2, 4, 16       # batch=2, channels=4, spatial length=16
    K = 3                    # SpatialAttention default kernel_size=3 -> padding=1

    key = jax.random.PRNGKey(0)
    kx, kw = jax.random.split(key)
    x = jax.random.normal(kx, (B, C, L), jnp.float32)
    # Conv1d(2, 1, 3, padding=1, bias=False) weight, PyTorch layout (1, 2, 3)
    w = jax.random.normal(kw, (1, 2, K), jnp.float32) * 0.5

    w_flat = prepare_weights(w, C)               # hoisted, one-time param prep

    fwd = jax.jit(functools.partial(spatial_attention_forward, kernel_size=K))
    out = jax.block_until_ready(fwd(x, w_flat))
    assert out.shape == (B, 1, L), out.shape

    ref = jax.block_until_ready(spatial_attention_reference(x, w))
    assert bool(jnp.allclose(out, ref, atol=1e-5, rtol=1e-5)), (out, ref)

    print("KERNEL_OK")
</pallas_src>

<mosaic_0001>
module attributes {stable_mosaic.version = 11 : i64} {
  func.func @_spatial_attention_kernel(%arg0: i32, %arg1: memref<6xf32, #tpu.memory_space<smem>>, %arg2: memref<2x4x16xf32, #tpu.memory_space<vmem>>, %arg3: memref<2x16xf32, #tpu.memory_space<vmem>>, %arg4: memref<2x18xf32, #tpu.memory_space<vmem>>, %arg5: memref<2x18xf32, #tpu.memory_space<vmem>>) attributes {dimension_semantics = [#tpu.dimension_semantics<parallel>], iteration_bounds = array<i64: 1>, scalar_prefetch = 1 : i64, scratch_operands = 2 : i64, tpu.core_type = #tpu.core_type<tc>, window_params = [{transform_indices = @transform_0, window_bounds = array<i64: 2, 4, 16>}, {transform_indices = @transform_1, window_bounds = array<i64: 2, 16>}]} {
    %c0 = arith.constant 0 : index
    %c0_0 = arith.constant 0 : index
    %c0_1 = arith.constant 0 : index
    %0 = vector.load %arg2[%c0, %c0_0, %c0_1] : memref<2x4x16xf32, #tpu.memory_space<vmem>>, vector<2x4x16xf32>
    %cst = arith.constant dense<0.000000e+00> : vector<2x16xf32>
    %1 = vector.multi_reduction <add>, %0, %cst [1] : vector<2x4x16xf32> to vector<2x16xf32>
    %cst_2 = arith.constant dense<0xFF800000> : vector<2x16xf32>
    %2 = vector.multi_reduction <maximumf>, %0, %cst_2 [1] : vector<2x4x16xf32> to vector<2x16xf32>
    %cst_3 = arith.constant 0.000000e+00 : f32
    %3 = vector.broadcast %cst_3 : f32 to vector<2x1xf32>
    %c0_4 = arith.constant 0 : index
    %c0_5 = arith.constant 0 : index
    %4 = vector.load %arg4[%c0_4, %c0_5] : memref<2x18xf32, #tpu.memory_space<vmem>>, vector<2x1xf32>
    tpu.vector_store %arg4[%c0_4, %c0_5], %3 {strides = array<i32>} : memref<2x18xf32, #tpu.memory_space<vmem>>, vector<2x1xf32>,
    %c0_6 = arith.constant 0 : index
    %c17 = arith.constant 17 : index
    %5 = vector.load %arg4[%c0_6, %c17] : memref<2x18xf32, #tpu.memory_space<vmem>>, vector<2x1xf32>
    tpu.vector_store %arg4[%c0_6, %c17], %3 {strides = array<i32>} : memref<2x18xf32, #tpu.memory_space<vmem>>, vector<2x1xf32>,
    %c0_7 = arith.constant 0 : index
    %c0_8 = arith.constant 0 : index
    %6 = vector.load %arg5[%c0_7, %c0_8] : memref<2x18xf32, #tpu.memory_space<vmem>>, vector<2x1xf32>
    tpu.vector_store %arg5[%c0_7, %c0_8], %3 {strides = array<i32>} : memref<2x18xf32, #tpu.memory_space<vmem>>, vector<2x1xf32>,
    %c0_9 = arith.constant 0 : index
    %c17_10 = arith.constant 17 : index
    %7 = vector.load %arg5[%c0_9, %c17_10] : memref<2x18xf32, #tpu.memory_space<vmem>>, vector<2x1xf32>
    tpu.vector_store %arg5[%c0_9, %c17_10], %3 {strides = array<i32>} : memref<2x18xf32, #tpu.memory_space<vmem>>, vector<2x1xf32>,
    %c0_11 = arith.constant 0 : index
    %c1 = arith.constant 1 : index
    %8 = vector.load %arg4[%c0_11, %c1] : memref<2x18xf32, #tpu.memory_space<vmem>>, vector<2x16xf32>
    tpu.vector_store %arg4[%c0_11, %c1], %1 {strides = array<i32>} : memref<2x18xf32, #tpu.memory_space<vmem>>, vector<2x16xf32>,
    %c0_12 = arith.constant 0 : index
    %c1_13 = arith.constant 1 : index
    %9 = vector.load %arg5[%c0_12, %c1_13] : memref<2x18xf32, #tpu.memory_space<vmem>>, vector<2x16xf32>
    tpu.vector_store %arg5[%c0_12, %c1_13], %2 {strides = array<i32>} : memref<2x18xf32, #tpu.memory_space<vmem>>, vector<2x16xf32>,
    %c0_14 = arith.constant 0 : index
    %10 = memref.load %arg1[%c0_14] : memref<6xf32, #tpu.memory_space<smem>>
    %c1_15 = arith.constant 1 : index
    %11 = memref.load %arg1[%c1_15] : memref<6xf32, #tpu.memory_space<smem>>
    %c2 = arith.constant 2 : index
    %12 = memref.load %arg1[%c2] : memref<6xf32, #tpu.memory_space<smem>>
    %c3 = arith.constant 3 : index
    %13 = memref.load %arg1[%c3] : memref<6xf32, #tpu.memory_space<smem>>
    %c4 = arith.constant 4 : index
    %14 = memref.load %arg1[%c4] : memref<6xf32, #tpu.memory_space<smem>>
    %c5 = arith.constant 5 : index
    %15 = memref.load %arg1[%c5] : memref<6xf32, #tpu.memory_space<smem>>
    %c0_16 = arith.constant 0 : index
    %c0_17 = arith.constant 0 : index
    %16 = vector.load %arg4[%c0_16, %c0_17] : memref<2x18xf32, #tpu.memory_space<vmem>>, vector<2x16xf32>
    %17 = vector.broadcast %10 : f32 to vector<2x16xf32>
    %18 = arith.mulf %17, %16 : vector<2x16xf32>
    %c0_18 = arith.constant 0 : index
    %c0_19 = arith.constant 0 : index
    %19 = vector.load %arg5[%c0_18, %c0_19] : memref<2x18xf32, #tpu.memory_space<vmem>>, vector<2x16xf32>
    %20 = vector.broadcast %13 : f32 to vector<2x16xf32>
    %21 = arith.mulf %20, %19 : vector<2x16xf32>
    %22 = arith.addf %18, %21 : vector<2x16xf32>
    %c0_20 = arith.constant 0 : index
    %c1_21 = arith.constant 1 : index
    %23 = vector.load %arg4[%c0_20, %c1_21] : memref<2x18xf32, #tpu.memory_space<vmem>>, vector<2x16xf32>
    %24 = vector.broadcast %11 : f32 to vector<2x16xf32>
    %25 = arith.mulf %24, %23 : vector<2x16xf32>
    %26 = arith.addf %22, %25 : vector<2x16xf32>
    %c0_22 = arith.constant 0 : index
    %c1_23 = arith.constant 1 : index
    %27 = vector.load %arg5[%c0_22, %c1_23] : memref<2x18xf32, #tpu.memory_space<vmem>>, vector<2x16xf32>
    %28 = vector.broadcast %14 : f32 to vector<2x16xf32>
    %29 = arith.mulf %28, %27 : vector<2x16xf32>
    %30 = arith.addf %26, %29 : vector<2x16xf32>
    %c0_24 = arith.constant 0 : index
    %c2_25 = arith.constant 2 : index
    %31 = vector.load %arg4[%c0_24, %c2_25] : memref<2x18xf32, #tpu.memory_space<vmem>>, vector<2x16xf32>
    %32 = vector.broadcast %12 : f32 to vector<2x16xf32>
    %33 = arith.mulf %32, %31 : vector<2x16xf32>
    %34 = arith.addf %30, %33 : vector<2x16xf32>
    %c0_26 = arith.constant 0 : index
    %c2_27 = arith.constant 2 : index
    %35 = vector.load %arg5[%c0_26, %c2_27] : memref<2x18xf32, #tpu.memory_space<vmem>>, vector<2x16xf32>
    %36 = vector.broadcast %15 : f32 to vector<2x16xf32>
    %37 = arith.mulf %36, %35 : vector<2x16xf32>
    %38 = arith.addf %34, %37 : vector<2x16xf32>
    %39 = arith.negf %38 : vector<2x16xf32>
    %40 = math.exp %39 : vector<2x16xf32>
    %cst_28 = arith.constant 1.000000e+00 : f32
    %41 = vector.broadcast %cst_28 : f32 to vector<2x16xf32>
    %42 = arith.addf %41, %40 : vector<2x16xf32>
    %43 = arith.divf %41, %42 : vector<2x16xf32>
    %c0_29 = arith.constant 0 : index
    %c0_30 = arith.constant 0 : index
    %44 = vector.load %arg3[%c0_29, %c0_30] : memref<2x16xf32, #tpu.memory_space<vmem>>, vector<2x16xf32>
    tpu.vector_store %arg3[%c0_29, %c0_30], %43 {strides = array<i32>} : memref<2x16xf32, #tpu.memory_space<vmem>>, vector<2x16xf32>,
    return
  }
  func.func @transform_0(%arg0: i32, %arg1: memref<6xf32, #tpu.memory_space<smem>>) -> (i32, i32, i32) {
    %c0_i32 = arith.constant 0 : i32
    %c0_i32_0 = arith.constant 0 : i32
    %c0_i32_1 = arith.constant 0 : i32
    return %arg0, %c0_i32, %c0_i32_0 : i32, i32, i32
  }
  func.func @transform_1(%arg0: i32, %arg1: memref<6xf32, #tpu.memory_space<smem>>) -> (i32, i32) {
    %c0_i32 = arith.constant 0 : i32
    %c0_i32_0 = arith.constant 0 : i32
    return %arg0, %c0_i32 : i32, i32
  }
}

</mosaic_0001>

<llo_original>
// kernel: spatial_attention_forward.1
$region0: #{spatial_attention_forward.1}
  #allocation0 [shape = 'u32[]', space=smem, size = 0x4, offset = 0x4, fixed_abs, tag = 'smem constant byte address 0x4 - core index']
  #allocation1 [shape = 'u32[144,128]{1,0:T(1,128)}', space=vmem, size = 0x12000, scoped, tag = 'internal scratch']
  #allocation2 [shape = 'f32[2,18]{1,0:T(2,128)}', space=vmem, size = 0x400, scoped, tag = 'scratch operand']
  #allocation3 [shape = 'f32[2,18]{1,0:T(2,128)}', space=vmem, size = 0x400, scoped, tag = 'scratch operand']
  #allocation4 [shape = 's32[1]{0}', space=sflag, size = 0x4, scoped, tag = 'scoped memory for spatial_attention_forward.1']
  #allocation5 [shape = 'u8[512]{0}', space=smem, size = 0x200, scoped, tag = 'prefetched SMEM operand 0']
  %s0 = inlined_call_operand.vmem [shape: f32[6], index: 0, kind: input, shape index: {}]
  %s1 = inlined_call_operand.hbm [shape: f32[2,4,16], index: 1, kind: input, shape index: {}]
  %s2 = inlined_call_operand.hbm [shape: f32[2,16], index: 2, kind: output, shape index: {}]
  %s3 = sld [smem:[#allocation0]]
  $region18: #{spatial_attention_forward.1} parent=0
    _
  %s5 = ssub.s32 1, %s3
  %s6 = scalar_select 0, %s5, %s3
  %s7 = sshll.u32 %s0, 4
  %s8 = int_to_ptr.vmem [resolvable:$true] %s7
  %10 = dma.vmem_to_smem %s8, 16, [#allocation5], [#allocation4]
  %11 = dma.done [#allocation4], 16
  %12 = sfence
  $region1: #{spatial_attention_forward.1} parent=0
    #allocation6 [shape = 'u8[4096]{0}', space=vmem, size = 0x1000, scoped, tag = 'input window, operand 1, single buffered']
    #allocation7 [shape = 's32[1]{0}', space=sflag, size = 0x4, scoped, tag = 'scoped memory for spatial_attention_forward.1']
    #allocation8 [shape = 's32[1]{0}', space=sflag, size = 0x4, scoped, tag = 'scoped memory for spatial_attention_forward.1']
    #allocation9 [shape = 'u8[1024]{0}', space=vmem, size = 0x400, scoped, tag = 'output window, operand 0, single buffered']
    %13 = vsyncpa [#allocation7], 0
    %14 = vsyncpa [#allocation8], 0
    // Predicated region
    $region2: #{spatial_attention_forward.1} parent=1 // pred_check
      _
    $region3: #{spatial_attention_forward.1} parent=1 // pred_check_branch
      %16 = sbr.rel (0) target = $region5
    $region4: #{spatial_attention_forward.1} parent=1 // pred_region
      %s18 = ssub.s32 128, 128
      %19 = vsyncadd [#allocation7], %s18
      %s20 = sshll.u32 [#allocation6], 4
      %s21 = int_to_ptr.vmem [resolvable:$true] %s20
      %26 = dma.hbm_to_vmem [thread:$0]  %s1, 128, %s21, [#allocation7], 64, 64, 4
    $region5: #{spatial_attention_forward.1} parent=1 // pred_fallthru
      _
    // Predicated region
    $region6: #{spatial_attention_forward.1} parent=1 // pred_check
      _
    $region7: #{spatial_attention_forward.1} parent=1 // pred_check_branch
      %28 = sbr.rel (0) target = $region9
    $region8: #{spatial_attention_forward.1} parent=1 // pred_region
      %29 = dma.done [#allocation7], 128
    $region9: #{spatial_attention_forward.1} parent=1 // pred_fallthru
      _
    %v30 = vld [vmem:[#allocation6] sm:$0xf]
    %v31 = vld [vmem:[#allocation6 + $0x4] sm:$0xf]
    %vm32 = vcmask 125952
    %v33 = vsel %vm32, %v30, 0.0
    %v34 = vrot.slane %v33, 4
    %v35 = vadd.f32 %v33, %v34
    %v36 = vrot.slane %v35, 2
    %v37 = vadd.f32 %v35, %v36
    %v38 = vrot.slane %v37, 1
    %v39 = vadd.f32 %v37, %v38
    %v40 = vsel %vm32, %v31, 0.0
    %v41 = vrot.slane %v40, 4
    %v42 = vadd.f32 %v40, %v41
    %v43 = vrot.slane %v42, 2
    %v44 = vadd.f32 %v42, %v43
    %v45 = vrot.slane %v44, 1
    %v46 = vadd.f32 %v44, %v45
    %v47 = vsel %vm32, %v30, -inf
    %v48 = vrot.slane %v47, 4
    %v49 = vmax.f32 %v47, %v48
    %v50 = vrot.slane %v49, 2
    %v51 = vmax.f32 %v49, %v50
    %v52 = vrot.slane %v51, 1
    %v53 = vmax.f32 %v51, %v52
    %v54 = vsel %vm32, %v31, -inf
    %v55 = vrot.slane %v54, 4
    %v56 = vmax.f32 %v54, %v55
    %v57 = vrot.slane %v56, 2
    %v58 = vmax.f32 %v56, %v57
    %v59 = vrot.slane %v58, 1
    %v60 = vmax.f32 %v58, %v59
    %vm61 = vcmask 1024
    %62 = vst.msk [vmem:[#allocation2] sm:$0x3] %vm61, 0.0
    %vm63 = vcmask 140424
    %64 = vst.msk [vmem:[#allocation2] sm:$0x3] %vm63, 0.0
    %65 = vst.msk [vmem:[#allocation3] sm:$0x3] %vm61, 0.0
    %66 = vst.msk [vmem:[#allocation3] sm:$0x3] %vm63, 0.0
    %vm69 = vcmask 1041409
    %v70 = vsel %vm69, %v46, %v39
    %71 = vrot.lane.b32.xlu0 %v70, 1
    %v72 = vpop.permute.xlu0 %71
    %vm74 = vcmask 132104
    %75 = vst.msk [vmem:[#allocation2] sm:$0x3] %vm74, %v72
    %v78 = vsel %vm69, %v60, %v53
    %79 = vrot.lane.b32.xlu0 %v78, 1
    %v80 = vpop.permute.xlu0 %79
    %82 = vst.msk [vmem:[#allocation3] sm:$0x3] %vm74, %v80
    %s83 = sld [smem:[#allocation5]]
    %s84 = sld [smem:[#allocation5 + $0x1]]
    %s85 = sld [smem:[#allocation5 + $0x2]]
    %s86 = sld [smem:[#allocation5 + $0x3]]
    %s87 = sld [smem:[#allocation5 + $0x4]]
    %s88 = sld [smem:[#allocation5 + $0x5]]
    %v89 = vld [vmem:[#allocation2] sm:$0x3]
    %v90 = vstv %s83
    %v91 = vmul.f32 %v90, %v89
    %v92 = vld [vmem:[#allocation3] sm:$0x3]
    %v93 = vstv %s86
    %v94 = vmul.f32 %v93, %v92
    %v95 = vadd.f32 %v91, %v94
    %v96 = vstv %s84
    %v97 = vmul.f32 %v96, %v89
    %99 = vrot.lane.b32.xlu0 %v97, 127
    %v100 = vpop.permute.xlu0 %99
    %v102 = vadd.f32 %v95, %v100
    %v103 = vstv %s87
    %v104 = vmul.f32 %v103, %v92
    %106 = vrot.lane.b32.xlu0 %v104, 127
    %v107 = vpop.permute.xlu0 %106
    %v109 = vadd.f32 %v102, %v107
    %v110 = vstv %s85
    %v111 = vmul.f32 %v110, %v89
    %113 = vrot.lane.b32.xlu0 %v111, 126
    %v114 = vpop.permute.xlu0 %113
    %v116 = vadd.f32 %v109, %v114
    %v117 = vstv %s88
    %v118 = vmul.f32 %v117, %v92
    %120 = vrot.lane.b32.xlu0 %v118, 126
    %v121 = vpop.permute.xlu0 %120
    %v123 = vadd.f32 %v116, %v121
    %v124 = vxor.u32 %v123, 2147483648
    %v125 = vmul.f32 %v124, 1.442695
    %v126 = vpow.pop %v125
    %v127 = vadd.f32 %v126, 1.0
    %v128 = vrcp.pop %v127
    %v129 = vmul.f32 1.0, %v128
    %vm130 = vcmask 123904
    %131 = vst.msk [vmem:[#allocation9] sm:$0x3] %vm130, %v129
    // Predicated region
    $region10: #{spatial_attention_forward.1} parent=1 // pred_check
      _
    $region11: #{spatial_attention_forward.1} parent=1 // pred_check_branch
      %133 = sbr.rel (0) target = $region13
    $region12: #{spatial_attention_forward.1} parent=1 // pred_region
      %s135 = ssub.s32 32, 32
      %136 = vsyncadd [#allocation8], %s135
      %s138 = sshll.u32 [#allocation9], 4
      %s139 = int_to_ptr.vmem [resolvable:$true] %s138
      %141 = dma.vmem_to_hbm [thread:$0]  %s139, 32, %s2, [#allocation8]
    $region13: #{spatial_attention_forward.1} parent=1 // pred_fallthru
      _
    // Predicated region
    $region14: #{spatial_attention_forward.1} parent=1 // pred_check
      _
    $region15: #{spatial_attention_forward.1} parent=1 // pred_check_branch
      %143 = sbr.rel (0) target = $region17
    $region16: #{spatial_attention_forward.1} parent=1 // pred_region
      %144 = dma.done [#allocation8], 32
    $region17: #{spatial_attention_forward.1} parent=1 // pred_fallthru
      _
    %145 = vsyncpa [#allocation7], 1
    %146 = vsyncpa [#allocation8], 1

</llo_original>
